<compile_context>
chip_gen: v7x
topology: tpu7x:2x2x1
jax: 0.10.0
libtpu: 0.0.40
codegen_flags: <defaults>
</compile_context>

<pallas_src>
import math

import jax
import jax.numpy as jnp
from jax.experimental import pallas as pl
from jax.experimental.pallas import tpu as pltpu

BN_EPS = 1e-5
LEAKY_SLOPE = 0.01  # F.leaky_relu default negative_slope


# ----------------------------------------------------------------------------
# Pallas kernels
# ----------------------------------------------------------------------------
def _conv3x3_tap(x, w, scale, bias, *, residual=None, shortcut=None, act=True):
    """Stride-1 3x3 conv (pad=1) + folded BN + optional residual/1x1-shortcut + leaky-relu.

    The 9 (kh, kw) taps are accumulated inside the kernel from the padded NHWC
    block, so activations are read from HBM exactly once (no im2col blow-up).

    x:        (N, H, W, Cin)  bf16
    w:        (9*Cin, Cout)   bf16, K ordered (kh, kw, cin)
    scale/b:  (Cout,)         f32  (folded BN)
    residual: (N, H, W, Cout) bf16 identity residual, or None
    shortcut: (xs, ws, ss, bs) fused 1x1-conv shortcut: xs (N,H,W,Cs) bf16,
              ws (Cs, Cout) bf16, ss/bs (Cout,) f32.
    returns:  (N, H, W, Cout) bf16
    """
    N, H, W, Cin = x.shape
    K9, Cout = w.shape
    assert K9 == 9 * Cin and W % 8 == 0
    xp = jnp.pad(x, ((0, 0), (1, 1), (1, 1), (0, 0)))
    Hp, Wp = H + 2, W + 2

    has_res = residual is not None
    has_sc = shortcut is not None
    if has_sc:
        xs, ws, ss, bs = shortcut
        Cs = xs.shape[-1]

    def kernel(x_ref, w_ref, s_ref, b_ref, *rest):
        o_ref = rest[-1]
        acc = None
        for t in range(9):           # unrolled tap loop: 9 small MXU GEMMs
            kh, kw = t // 3, t % 3
            xt = x_ref[:, pl.ds(kh, H), pl.ds(kw, W), :].reshape(H * W, Cin)
            wt = w_ref[pl.ds(t * Cin, Cin), :]
            d = jnp.dot(xt, wt, preferred_element_type=jnp.float32)
            acc = d if acc is None else acc + d
        y = acc * s_ref[...] + b_ref[...]            # folded (eval-mode) BatchNorm
        idx = 0
        if has_res:                                   # identity residual
            y = y + rest[idx][...].reshape(H * W, Cout).astype(jnp.float32)
            idx += 1
        if has_sc:                                    # fused 1x1 conv + BN shortcut
            xs_ref, ws_ref, ss_ref, bs_ref = rest[idx:idx + 4]
            sc = jnp.dot(xs_ref[...].reshape(H * W, Cs), ws_ref[...],
                         preferred_element_type=jnp.float32)
            y = y + sc * ss_ref[...] + bs_ref[...]
        if act:
            y = jnp.where(y > 0, y, LEAKY_SLOPE * y)  # leaky_relu
        o_ref[...] = y.reshape(1, H, W, Cout).astype(o_ref.dtype)

    in_specs = [
        pl.BlockSpec((1, Hp, Wp, Cin), lambda n: (n, 0, 0, 0)),
        pl.BlockSpec((K9, Cout), lambda n: (0, 0)),
        pl.BlockSpec((1, Cout), lambda n: (0, 0)),
        pl.BlockSpec((1, Cout), lambda n: (0, 0)),
    ]
    args = [xp, w, scale.reshape(1, -1), bias.reshape(1, -1)]
    if has_res:
        in_specs.append(pl.BlockSpec((1, H, W, Cout), lambda n: (n, 0, 0, 0)))
        args.append(residual)
    if has_sc:
        in_specs += [
            pl.BlockSpec((1, H, W, Cs), lambda n: (n, 0, 0, 0)),
            pl.BlockSpec((Cs, Cout), lambda n: (0, 0)),
            pl.BlockSpec((1, Cout), lambda n: (0, 0)),
            pl.BlockSpec((1, Cout), lambda n: (0, 0)),
        ]
        args += [xs, ws, ss.reshape(1, -1), bs.reshape(1, -1)]

    return pl.pallas_call(
        kernel,
        out_shape=jax.ShapeDtypeStruct((N, H, W, Cout), jnp.bfloat16),
        grid=(N,),                                   # one image per step (parallel -> 2 TCs on v7x)
        in_specs=in_specs,
        out_specs=pl.BlockSpec((1, H, W, Cout), lambda n: (n, 0, 0, 0)),
        compiler_params=pltpu.CompilerParams(dimension_semantics=("parallel",)),
    )(*args)


def _gemm_bn_act(x2d, w2d, scale, bias, *, residual2d=None, shortcut=None, act=True,
                 out_dtype=jnp.bfloat16):
    """out = leaky_relu?((x2d @ w2d)*scale + bias [+ residual] [+ fused 1x1 shortcut]).

    bf16 GEMM inputs, f32 accumulate/epilogue.  Used for the stem conv and for the
    small stride-2 / 4x4 convs where im2col materialization is negligible.
    """
    M, K = x2d.shape
    _, Nc = w2d.shape
    tm = min(256, M)
    tn = min(256, Nc)                 # 256-wide output tiles fill the v6e/v7x MXU
    if M % tm:
        tm = M
    if Nc % tn:
        tn = Nc
    grid = (M // tm, Nc // tn)

    has_res = residual2d is not None
    has_sc = shortcut is not None
    if has_sc:
        xs2d, ws, ss, bs = shortcut
        Ks = xs2d.shape[1]

    def kernel(x_ref, w_ref, s_ref, b_ref, *rest):
        o_ref = rest[-1]
        y = jnp.dot(x_ref[...], w_ref[...], preferred_element_type=jnp.float32)
        y = y * s_ref[...] + b_ref[...]              # folded (eval-mode) BatchNorm
        idx = 0
        if has_res:
            y = y + rest[idx][...].astype(jnp.float32)
            idx += 1
        if has_sc:
            xs_ref, ws_ref, ss_ref, bs_ref = rest[idx:idx + 4]
            sc = jnp.dot(xs_ref[...], ws_ref[...], preferred_element_type=jnp.float32)
            y = y + sc * ss_ref[...] + bs_ref[...]
        if act:
            y = jnp.where(y > 0, y, LEAKY_SLOPE * y)
        o_ref[...] = y.astype(o_ref.dtype)

    in_specs = [
        pl.BlockSpec((tm, K), lambda i, j: (i, 0)),
        pl.BlockSpec((K, tn), lambda i, j: (0, j)),
        pl.BlockSpec((1, tn), lambda i, j: (0, j)),
        pl.BlockSpec((1, tn), lambda i, j: (0, j)),
    ]
    args = [x2d, w2d, scale.reshape(1, -1), bias.reshape(1, -1)]
    if has_res:
        in_specs.append(pl.BlockSpec((tm, tn), lambda i, j: (i, j)))
        args.append(residual2d)
    if has_sc:
        in_specs += [
            pl.BlockSpec((tm, Ks), lambda i, j: (i, 0)),
            pl.BlockSpec((Ks, tn), lambda i, j: (0, j)),
            pl.BlockSpec((1, tn), lambda i, j: (0, j)),
            pl.BlockSpec((1, tn), lambda i, j: (0, j)),
        ]
        args += [xs2d, ws, ss.reshape(1, -1), bs.reshape(1, -1)]

    return pl.pallas_call(
        kernel,
        out_shape=jax.ShapeDtypeStruct((M, Nc), out_dtype),
        grid=grid,
        in_specs=in_specs,
        out_specs=pl.BlockSpec((tm, tn), lambda i, j: (i, j)),
        compiler_params=pltpu.CompilerParams(
            dimension_semantics=("parallel", "parallel")),
    )(*args)


def _head_pool_linear(x3d, w, b):
    """F.avg_pool2d(out, 4) (global here) + flatten + Linear in one small kernel."""
    N, P, C = x3d.shape
    nc = w.shape[1]

    def kernel(x_ref, w_ref, b_ref, o_ref):
        pooled = jnp.mean(x_ref[...].astype(jnp.float32), axis=1)   # avg pool
        o_ref[...] = (jnp.dot(pooled, w_ref[...],
                              preferred_element_type=jnp.float32) + b_ref[...])

    return pl.pallas_call(
        kernel,
        out_shape=jax.ShapeDtypeStruct((N, nc), jnp.float32),
        grid=(1,),
        in_specs=[pl.BlockSpec((N, P, C), lambda i: (0, 0, 0)),
                  pl.BlockSpec((C, nc), lambda i: (0, 0)),
                  pl.BlockSpec((1, nc), lambda i: (0, 0))],
        out_specs=pl.BlockSpec((N, nc), lambda i: (0, 0)),
    )(x3d, w, b.reshape(1, -1))


# ----------------------------------------------------------------------------
# Glue: im2col fallback, parameter init, network assembly
# ----------------------------------------------------------------------------
def _im2col_3x3(x, stride):
    """x: (N, H, W, C) NHWC -> (N*Ho*Wo, 9*C), patch order (kh, kw, cin); pad=1."""
    N, H, W, C = x.shape
    xp = jnp.pad(x, ((0, 0), (1, 1), (1, 1), (0, 0)))
    Ho = (H + 2 - 3) // stride + 1
    Wo = (W + 2 - 3) // stride + 1
    cols = []
    for kh in range(3):
        for kw in range(3):
            cols.append(xp[:, kh:kh + (Ho - 1) * stride + 1:stride,
                           kw:kw + (Wo - 1) * stride + 1:stride, :])
    cols = jnp.concatenate(cols, axis=-1)          # (N, Ho, Wo, 9*C)
    return cols.reshape(N * Ho * Wo, 9 * C), (N, Ho, Wo)


def _kaiming_conv(key, kh, kw, cin, cout):
    # nn.init.kaiming_normal_(mode='fan_out', nonlinearity='relu'), stored bf16 for MXU
    fan_out = cout * kh * kw
    std = math.sqrt(2.0 / fan_out)
    w = std * jax.random.normal(key, (kh * kw * cin, cout), jnp.float32)
    return w.astype(jnp.bfloat16)


def _bn_fold(c):
    # eval-mode BN with gamma=1, beta=0, running_mean=0, running_var=1
    scale = jnp.full((c,), 1.0 / math.sqrt(1.0 + BN_EPS), jnp.float32)
    bias = jnp.zeros((c,), jnp.float32)
    return scale, bias


def init_resnet_params(key, num_blocks=(1, 1, 1, 1), num_classes=10):
    keys = iter(jax.random.split(key, 64))
    params = {}
    params['conv1_w'] = _kaiming_conv(next(keys), 3, 3, 3, 64)
    params['bn1_s'], params['bn1_b'] = _bn_fold(64)

    in_planes = 64
    layers = []
    for planes, nb, first_stride in zip((64, 128, 256, 512), num_blocks, (1, 2, 2, 2)):
        strides = [first_stride] + [1] * (nb - 1)
        blocks = []
        for s in strides:
            blk = {'stride': s, 'planes': planes,
                   'w1': _kaiming_conv(next(keys), 3, 3, in_planes, planes),
                   'w2': _kaiming_conv(next(keys), 3, 3, planes, planes)}
            blk['s1'], blk['b1'] = _bn_fold(planes)
            blk['s2'], blk['b2'] = _bn_fold(planes)
            if s != 1 or in_planes != planes:       # BasicBlock expansion = 1
                blk['ws'] = _kaiming_conv(next(keys), 1, 1, in_planes, planes)
                blk['ss'], blk['bs'] = _bn_fold(planes)
            blocks.append(blk)
            in_planes = planes
        layers.append(blocks)
    params['layers'] = layers

    # nn.Linear(512, num_classes) default init: U(-1/sqrt(fan_in), 1/sqrt(fan_in))
    bound = 1.0 / math.sqrt(512)
    params['lin_w'] = jax.random.uniform(next(keys), (512, num_classes),
                                         jnp.float32, -bound, bound)
    params['lin_b'] = jax.random.uniform(next(keys), (num_classes,),
                                         jnp.float32, -bound, bound)
    return params


def _basic_block(x, p):
    """out = act(bn2(conv2(act(bn1(conv1(x))))) + shortcut(x)) with fused Pallas kernels."""
    N, H, W, Cin = x.shape
    s = p['stride']
    Cout = p['planes']
    Ho, Wo = H // s, W // s

    # conv1 + bn1 + act
    if s == 1:
        h = _conv3x3_tap(x, p['w1'], p['s1'], p['b1'], act=True)
    else:
        cols1, _ = _im2col_3x3(x, s)                 # small (stride-2) layers only
        h = _gemm_bn_act(cols1, p['w1'], p['s1'], p['b1'], act=True)
        h = h.reshape(N, Ho, Wo, Cout)

    # conv2 + bn2 (+ fused downsample shortcut OR identity residual) + act
    need_sc = (s != 1) or (Cin != Cout)
    if need_sc:
        xs = x[:, ::s, ::s, :]                       # 1x1 conv stride-s input, (N,Ho,Wo,Cin)
    if Wo % 8 == 0:
        if need_sc:
            out = _conv3x3_tap(h, p['w2'], p['s2'], p['b2'],
                               shortcut=(xs, p['ws'], p['ss'], p['bs']), act=True)
        else:
            out = _conv3x3_tap(h, p['w2'], p['s2'], p['b2'], residual=x, act=True)
    else:
        # tiny spatial (e.g. 4x4 layer4): bf16 im2col GEMM fallback, shortcut still fused
        cols2, _ = _im2col_3x3(h, 1)
        if need_sc:
            out2d = _gemm_bn_act(cols2, p['w2'], p['s2'], p['b2'],
                                 shortcut=(xs.reshape(N * Ho * Wo, Cin),
                                           p['ws'], p['ss'], p['bs']), act=True)
        else:
            out2d = _gemm_bn_act(cols2, p['w2'], p['s2'], p['b2'],
                                 residual2d=x.reshape(N * Ho * Wo, Cin), act=True)
        out = out2d.reshape(N, Ho, Wo, Cout)
    return out


def resnet_forward(x_nchw, params):
    x = jnp.transpose(x_nchw, (0, 2, 3, 1)).astype(jnp.bfloat16)   # NCHW -> NHWC, bf16
    N, H, W, _ = x.shape

    # stem: Cin=3 so im2col is tiny; fused conv1 + bn1 + act GEMM
    cols, _ = _im2col_3x3(x, 1)
    out = _gemm_bn_act(cols, params['conv1_w'],
                       params['bn1_s'], params['bn1_b'], act=True)
    out = out.reshape(N, H, W, 64)

    for layer in params['layers']:
        for blk in layer:
            out = _basic_block(out, blk)

    N, H, W, C = out.shape
    assert H == 4 and W == 4 and C == 512            # avg_pool2d(out, 4) is global here
    logits = _head_pool_linear(out.reshape(N, H * W, C),
                               params['lin_w'], params['lin_b'])
    return logits


if __name__ == "__main__":
    key = jax.random.PRNGKey(0)
    pkey, xkey = jax.random.split(key)
    params = init_resnet_params(pkey, num_blocks=(1, 1, 1, 1), num_classes=10)
    x = jax.random.normal(xkey, (2, 3, 32, 32), jnp.float32)       # NCHW, CIFAR-sized
    logits = resnet_forward(x, params)
    logits = jax.block_until_ready(logits)
    assert logits.shape == (2, 10) and logits.dtype == jnp.float32
    print("KERNEL_OK")
</pallas_src>

<mosaic_0001>
module attributes {stable_mosaic.version = 11 : i64} {
  func.func @kernel(%arg0: i32, %arg1: i32, %arg2: memref<256x27xbf16, #tpu.memory_space<vmem>>, %arg3: memref<27x64xbf16, #tpu.memory_space<vmem>>, %arg4: memref<1x64xf32, #tpu.memory_space<vmem>>, %arg5: memref<1x64xf32, #tpu.memory_space<vmem>>, %arg6: memref<256x64xbf16, #tpu.memory_space<vmem>>) attributes {dimension_semantics = [#tpu.dimension_semantics<parallel>, #tpu.dimension_semantics<parallel>], iteration_bounds = array<i64: 8, 1>, scalar_prefetch = 0 : i64, scratch_operands = 0 : i64, tpu.core_type = #tpu.core_type<tc>, window_params = [{transform_indices = @transform_0, window_bounds = array<i64: 256, 27>}, {transform_indices = @transform_1, window_bounds = array<i64: 27, 64>}, {transform_indices = @transform_2, window_bounds = array<i64: 1, 64>}, {transform_indices = @transform_3, window_bounds = array<i64: 1, 64>}, {transform_indices = @transform_4, window_bounds = array<i64: 256, 64>}]} {
    %c0 = arith.constant 0 : index
    %c0_0 = arith.constant 0 : index
    %0 = vector.load %arg2[%c0, %c0_0] : memref<256x27xbf16, #tpu.memory_space<vmem>>, vector<256x27xbf16>
    %c0_1 = arith.constant 0 : index
    %c0_2 = arith.constant 0 : index
    %1 = vector.load %arg3[%c0_1, %c0_2] : memref<27x64xbf16, #tpu.memory_space<vmem>>, vector<27x64xbf16>
    %cst = arith.constant dense<0.000000e+00> : vector<256x64xf32>
    %2 = tpu.matmul %0, %1, %cst {dimension_numbers = #tpu.dot_dimension_numbers<[1], [0], [0], [1], [0, 0, 1, 1], [], []>} : vector<256x27xbf16>, vector<27x64xbf16>, vector<256x64xf32> -> vector<256x64xf32>
    %c0_3 = arith.constant 0 : index
    %c0_4 = arith.constant 0 : index
    %3 = vector.load %arg4[%c0_3, %c0_4] : memref<1x64xf32, #tpu.memory_space<vmem>>, vector<1x64xf32>
    %4 = vector.broadcast %3 : vector<1x64xf32> to vector<256x64xf32>
    %5 = arith.mulf %2, %4 : vector<256x64xf32>
    %c0_5 = arith.constant 0 : index
    %c0_6 = arith.constant 0 : index
    %6 = vector.load %arg5[%c0_5, %c0_6] : memref<1x64xf32, #tpu.memory_space<vmem>>, vector<1x64xf32>
    %7 = vector.broadcast %6 : vector<1x64xf32> to vector<256x64xf32>
    %8 = arith.addf %5, %7 : vector<256x64xf32>
    %cst_7 = arith.constant 0.000000e+00 : f32
    %9 = vector.broadcast %cst_7 : f32 to vector<256x64xf32>
    %10 = arith.cmpf ogt, %8, %9 : vector<256x64xf32>
    %cst_8 = arith.constant 0.00999999977 : f32
    %11 = vector.broadcast %cst_8 : f32 to vector<256x64xf32>
    %12 = arith.mulf %11, %8 : vector<256x64xf32>
    %13 = arith.select %10, %8, %12 : vector<256x64xi1>, vector<256x64xf32>
    %14 = arith.truncf %13 : vector<256x64xf32> to vector<256x64xbf16>
    %c0_9 = arith.constant 0 : index
    %c0_10 = arith.constant 0 : index
    %15 = vector.load %arg6[%c0_9, %c0_10] : memref<256x64xbf16, #tpu.memory_space<vmem>>, vector<256x64xbf16>
    tpu.vector_store %arg6[%c0_9, %c0_10], %14 {strides = array<i32>} : memref<256x64xbf16, #tpu.memory_space<vmem>>, vector<256x64xbf16>,
    return
  }
  func.func @transform_0(%arg0: i32, %arg1: i32) -> (i32, i32) {
    %c0_i32 = arith.constant 0 : i32
    %c0_i32_0 = arith.constant 0 : i32
    return %arg0, %c0_i32 : i32, i32
  }
  func.func @transform_1(%arg0: i32, %arg1: i32) -> (i32, i32) {
    %c0_i32 = arith.constant 0 : i32
    %c0_i32_0 = arith.constant 0 : i32
    return %c0_i32, %arg1 : i32, i32
  }
  func.func @transform_2(%arg0: i32, %arg1: i32) -> (i32, i32) {
    %c0_i32 = arith.constant 0 : i32
    %c0_i32_0 = arith.constant 0 : i32
    return %c0_i32, %arg1 : i32, i32
  }
  func.func @transform_3(%arg0: i32, %arg1: i32) -> (i32, i32) {
    %c0_i32 = arith.constant 0 : i32
    %c0_i32_0 = arith.constant 0 : i32
    return %c0_i32, %arg1 : i32, i32
  }
  func.func @transform_4(%arg0: i32, %arg1: i32) -> (i32, i32) {
    %c0_i32 = arith.constant 0 : i32
    return %arg0, %arg1 : i32, i32
  }
}

</mosaic_0001>

<llo_original>
// kernel: tpu_custom_call.1
$region0: #{tpu_custom_call.1}
  #allocation0 [shape = 'u32[]', space=smem, size = 0x4, offset = 0x4, fixed_abs, tag = 'smem constant byte address 0x4 - core index']
  #allocation1 [shape = 'u32[144,128]{1,0:T(1,128)}', space=vmem, size = 0x12000, scoped, tag = 'internal scratch']
  %s0 = inlined_call_operand.vmem [shape: bf16[2048,27], index: 0, kind: input, shape index: {}]
  %s1 = inlined_call_operand.vmem [shape: bf16[27,64], index: 1, kind: input, shape index: {}]
  %s2 = inlined_call_operand.vmem [shape: f32[1,64], index: 2, kind: input, shape index: {}]
  %s3 = inlined_call_operand.vmem [shape: f32[1,64], index: 3, kind: input, shape index: {}]
  %s4 = inlined_call_operand.vmem [shape: bf16[2048,64], index: 4, kind: output, shape index: {}]
  %s5 = sld [smem:[#allocation0]]
  $region49: #{tpu_custom_call.1} parent=0
    _
  %s7 = ssub.s32 1, %s5
  %s8 = scalar_select 0, %s7, %s5
  loop: start=0, step=1, limit=10
  $region2: #{tpu_custom_call.1} parent=0 // loop_pre_header
    _
  $region3: #{tpu_custom_call.1} parent=0 // loop_header
    %s10 = sphi 0, %s14
    %p11 = scmp.ge.s32.totalorder %s10, 10
    %s17 = sphi 0, %s29
    %s18 = sphi 0, %s25
    %s19 = sphi 0, %s17
    %s20 = sphi 0, %s18
    %s21 = sphi 0, %s19
    %s22 = sphi 0, %s20
    %s32 = sphi 0, %s34
    %s35 = sphi 0, %s32
    %s36 = sphi 0, %s35
    %s52 = sphi 0, %s36
    %s58 = sphi 0, %s60
    %s61 = sphi 0, %s58
    %s62 = sphi 0, %s61
    %s78 = sphi 0, %s62
    %s84 = sphi 0, %s86
    %s87 = sphi 0, %s84
    %s88 = sphi 0, %s87
    %s104 = sphi 0, %s88
    %s110 = sphi 0, %s112
    %s113 = sphi 0, %s110
    %s114 = sphi 0, %s113
    %s130 = sphi 0, %s114
    %s138 = sphi 0, %s140
    %s141 = sphi 0, %s138
    %s142 = sphi 0, %s141
    %s158 = sphi 0, %s142
  $region4: #{tpu_custom_call.1} parent=0 // loop_header_branch
    %13 = sbr.rel (%p11) target = $region8
  $region5: #{tpu_custom_call.1} parent=0 // loop_body
    %s15 = ssub.s32 %s10, 1
    %s16 = ssub.s32 %s10, 2
    %s23 = sadd.s32 1, %s18
    %p24 = scmp.ge.s32.totalorder %s23, 1
    %s25 = scalar_select %p24, 0, %s23
    %s26 = sadd.s32 1, %s17
    %s27 = scalar_select %p24, %s26, %s17
    %p28 = scmp.ge.s32.totalorder %s27, 8
    %s29 = scalar_select %p28, 0, %s27
    %s30 = ssub.s32 %s17, %s29
    %p31 = scmp.eq.s32.totalorder %s30, 0
    %s33 = sadd.s32 %s32, 1
    %s34 = scalar_select %p31, %s32, %s33
    %p37 = pneg %p31
    %p38 = scmp.eq.s32.totalorder %s10, 7
    %p39 = por %p37, %p38
    %p40 = scmp.ne.s32.totalorder %s32, %s35
    %p41 = scmp.eq.s32.totalorder %s10, 0
    %p42 = por %p40, %p41
    %p43 = scmp.ne.s32.totalorder %s32, %s35
    %p44 = scmp.eq.s32.totalorder %s15, 7
    %p45 = por %p43, %p44
    %p46 = scmp.ne.s32.totalorder %s35, %s36
    %p47 = scmp.eq.s32.totalorder %s15, 0
    %p48 = por %p46, %p47
    %p49 = scmp.ne.s32.totalorder %s35, %s36
    %p50 = scmp.eq.s32.totalorder %s16, 7
    %p51 = por %p49, %p50
    %p53 = scmp.ne.s32.totalorder %s36, %s52
    %p54 = scmp.eq.s32.totalorder %s16, 0
    %p55 = por %p53, %p54
    %s56 = ssub.s32 %s18, %s25
    %p57 = scmp.eq.s32.totalorder %s56, 0
    %s59 = sadd.s32 %s58, 1
    %s60 = scalar_select %p57, %s58, %s59
    %p63 = pneg %p57
    %p64 = scmp.eq.s32.totalorder %s10, 7
    %p65 = por %p63, %p64
    %p66 = scmp.ne.s32.totalorder %s58, %s61
    %p67 = scmp.eq.s32.totalorder %s10, 0
    %p68 = por %p66, %p67
    %p69 = scmp.ne.s32.totalorder %s58, %s61
    %p70 = scmp.eq.s32.totalorder %s15, 7
    %p71 = por %p69, %p70
    %p72 = scmp.ne.s32.totalorder %s61, %s62
    %p73 = scmp.eq.s32.totalorder %s15, 0
    %p74 = por %p72, %p73
    %p75 = scmp.ne.s32.totalorder %s61, %s62
    %p76 = scmp.eq.s32.totalorder %s16, 7
    %p77 = por %p75, %p76
    %p79 = scmp.ne.s32.totalorder %s62, %s78
    %p80 = scmp.eq.s32.totalorder %s16, 0
    %p81 = por %p79, %p80
    %s82 = ssub.s32 %s18, %s25
    %p83 = scmp.eq.s32.totalorder %s82, 0
    %s85 = sadd.s32 %s84, 1
    %s86 = scalar_select %p83, %s84, %s85
    %p89 = pneg %p83
    %p90 = scmp.eq.s32.totalorder %s10, 7
    %p91 = por %p89, %p90
    %p92 = scmp.ne.s32.totalorder %s84, %s87
    %p93 = scmp.eq.s32.totalorder %s10, 0
    %p94 = por %p92, %p93
    %p95 = scmp.ne.s32.totalorder %s84, %s87
    %p96 = scmp.eq.s32.totalorder %s15, 7
    %p97 = por %p95, %p96
    %p98 = scmp.ne.s32.totalorder %s87, %s88
    %p99 = scmp.eq.s32.totalorder %s15, 0
    %p100 = por %p98, %p99
    %p101 = scmp.ne.s32.totalorder %s87, %s88
    %p102 = scmp.eq.s32.totalorder %s16, 7
    %p103 = por %p101, %p102
    %p105 = scmp.ne.s32.totalorder %s88, %s104
    %p106 = scmp.eq.s32.totalorder %s16, 0
    %p107 = por %p105, %p106
    %s108 = ssub.s32 %s18, %s25
    %p109 = scmp.eq.s32.totalorder %s108, 0
    %s111 = sadd.s32 %s110, 1
    %s112 = scalar_select %p109, %s110, %s111
    %p115 = pneg %p109
    %p116 = scmp.eq.s32.totalorder %s10, 7
    %p117 = por %p115, %p116
    %p118 = scmp.ne.s32.totalorder %s110, %s113
    %p119 = scmp.eq.s32.totalorder %s10, 0
    %p120 = por %p118, %p119
    %p121 = scmp.ne.s32.totalorder %s110, %s113
    %p122 = scmp.eq.s32.totalorder %s15, 7
    %p123 = por %p121, %p122
    %p124 = scmp.ne.s32.totalorder %s113, %s114
    %p125 = scmp.eq.s32.totalorder %s15, 0
    %p126 = por %p124, %p125
    %p127 = scmp.ne.s32.totalorder %s113, %s114
    %p128 = scmp.eq.s32.totalorder %s16, 7
    %p129 = por %p127, %p128
    %p131 = scmp.ne.s32.totalorder %s114, %s130
    %p132 = scmp.eq.s32.totalorder %s16, 0
    %p133 = por %p131, %p132
    %s134 = ssub.s32 %s17, %s29
    %s135 = ssub.s32 %s18, %s25
    %s136 = sor.u32 %s134, %s135
    %p137 = scmp.eq.s32.totalorder %s136, 0
    %s139 = sadd.s32 %s138, 1
    %s140 = scalar_select %p137, %s138, %s139
    %p143 = pneg %p137
    %p144 = scmp.eq.s32.totalorder %s10, 7
    %p145 = por %p143, %p144
    %p146 = scmp.ne.s32.totalorder %s138, %s141
    %p147 = scmp.eq.s32.totalorder %s10, 0
    %p148 = por %p146, %p147
    %p149 = scmp.ne.s32.totalorder %s138, %s141
    %p150 = scmp.eq.s32.totalorder %s15, 7
    %p151 = por %p149, %p150
    %p152 = scmp.ne.s32.totalorder %s141, %s142
    %p153 = scmp.eq.s32.totalorder %s15, 0
    %p154 = por %p152, %p153
    %p155 = scmp.ne.s32.totalorder %s141, %s142
    %p156 = scmp.eq.s32.totalorder %s16, 7
    %p157 = por %p155, %p156
    %p159 = scmp.ne.s32.totalorder %s142, %s158
    %p160 = scmp.eq.s32.totalorder %s16, 0
    %p161 = por %p159, %p160
    %p162 = scmp.le.s32.totalorder 1, %s10
    %p163 = scmp.lt.s32.totalorder %s10, 9
    %p164 = pnand %p162, %p163
    %p165 = pneg %p164
    // Predicated region
    $region9: #{tpu_custom_call.1} parent=5 // pred_check
      _
    $region10: #{tpu_custom_call.1} parent=5 // pred_check_branch
      %167 = sbr.rel (%p164) target = $region12
    $region11: #{tpu_custom_call.1} parent=5 // pred_region
      %s168 = ssub.s32 %s10, 1
      // Predicated region
      $region13: #{tpu_custom_call.1} parent=11 // pred_check
        %p169 = pneg %p74
      $region14: #{tpu_custom_call.1} parent=11 // pred_check_branch
        %171 = sbr.rel (%p169) target = $region16
      $region15: #{tpu_custom_call.1} parent=11 // pred_region
        %p172 = scmp.lt.s32.totalorder %s20, 0
        %s173 = scalar_select %p172, %s20, 0
        %s174 = smul.addr %s173, 4
        %s175 = scalar_lea.vmem %s1, %s174
      $region16: #{tpu_custom_call.1} parent=11 // pred_fallthru
        _
      // Predicated region
      $region17: #{tpu_custom_call.1} parent=11 // pred_check
        %p176 = pneg %p100
      $region18: #{tpu_custom_call.1} parent=11 // pred_check_branch
        %178 = sbr.rel (%p176) target = $region20
      $region19: #{tpu_custom_call.1} parent=11 // pred_region
        %p179 = scmp.lt.s32.totalorder %s20, 0
        %s180 = scalar_select %p179, %s20, 0
        %s181 = scalar_lea.vmem %s2, %s180
      $region20: #{tpu_custom_call.1} parent=11 // pred_fallthru
        _
      // Predicated region
      $region21: #{tpu_custom_call.1} parent=11 // pred_check
        %p182 = pneg %p126
      $region22: #{tpu_custom_call.1} parent=11 // pred_check_branch
        %184 = sbr.rel (%p182) target = $region24
      $region23: #{tpu_custom_call.1} parent=11 // pred_region
        %p185 = scmp.lt.s32.totalorder %s20, 0
        %s186 = scalar_select %p185, %s20, 0
        %s187 = scalar_lea.vmem %s3, %s186
      $region24: #{tpu_custom_call.1} parent=11 // pred_fallthru
        _
    $region12: #{tpu_custom_call.1} parent=5 // pred_fallthru
      _
    %p188 = scmp.lt.s32.totalorder %s10, 8
    // Predicated region
    $region25: #{tpu_custom_call.1} parent=5 // pred_check
      %p189 = pneg %p188
    $region26: #{tpu_custom_call.1} parent=5 // pred_check_branch
      %191 = sbr.rel (%p189) target = $region28
    $region27: #{tpu_custom_call.1} parent=5 // pred_region
      // Predicated region
      $region29: #{tpu_custom_call.1} parent=27 // pred_check
        %p192 = pneg %p42
      $region30: #{tpu_custom_call.1} parent=27 // pred_check_branch
        %194 = sbr.rel (%p192) target = $region32
      $region31: #{tpu_custom_call.1} parent=27 // pred_region
        %s195 = smul.u32 32, %s17
        %p196 = scmp.lt.s32.totalorder %s195, 255
        %s197 = scalar_select %p196, %s195, 255
        %s198 = smul.addr %s197, 4
        %s199 = scalar_lea.vmem %s0, %s198
        %s200 = smul.u32 32, %s17
      $region32: #{tpu_custom_call.1} parent=27 // pred_fallthru
        _
    $region28: #{tpu_custom_call.1} parent=5 // pred_fallthru
      _
    %p201 = scmp.le.s32.totalorder 1, %s10
    %p202 = scmp.lt.s32.totalorder %s10, 9
    %p203 = pnand %p201, %p202
    %p204 = pneg %p203
    // Predicated region
    $region33: #{tpu_custom_call.1} parent=5 // pred_check
      _
    $region34: #{tpu_custom_call.1} parent=5 // pred_check_branch
      %206 = sbr.rel (%p203) target = $region36
    $region35: #{tpu_custom_call.1} parent=5 // pred_region
      %s207 = ssub.s32 %s10, 1
      %s208 = smul.u32 32, %s19
      %p209 = scmp.lt.s32.totalorder %s208, 255
      %s210 = scalar_select %p209, %s208, 255
      %s211 = smul.addr %s210, 4
      %s212 = scalar_lea.vmem %s0, %s211
      %p213 = pneg %p48
      %p214 = pneg %p45
      %p215 = scmp.lt.s32.totalorder %s20, 0
      %s216 = scalar_select %p215, %s20, 0
      %s217 = smul.addr %s216, 4
      %s218 = scalar_lea.vmem %s1, %s217
      %p219 = pneg %p74
      %p220 = pneg %p71
      %p221 = scmp.lt.s32.totalorder %s20, 0
      %s222 = scalar_select %p221, %s20, 0
      %s223 = scalar_lea.vmem %s2, %s222
      %p224 = pneg %p100
      %p225 = pneg %p97
      %p226 = scmp.lt.s32.totalorder %s20, 0
      %s227 = scalar_select %p226, %s20, 0
      %s228 = scalar_lea.vmem %s3, %s227
      %p229 = pneg %p126
      %p230 = pneg %p123
      %p231 = pneg %p154
      %p232 = pneg %p151
      %s233 = smul.u32 32, %s19
      %p234 = scmp.lt.s32.totalorder %s233, 255
      %s235 = scalar_select %p234, %s233, 255
      %p236 = scmp.lt.s32.totalorder %s20, 0
      %s237 = scalar_select %p236, %s20, 0
      %s238 = sadd.s32 %s237, %s235
      %s239 = smul.addr %s238, 4
      %s240 = scalar_lea.vmem %s4, %s239
      %s241 = smul.u32 32, %s19
      %p242 = scmp.lt.s32.totalorder %s241, 255
      %s243 = scalar_select %p242, %s241, 255
      %s244 = smul.addr %s243, 4
      %s245 = scalar_lea.vmem %s0, %s244
      %s246 = smul.u32 32, %s19
      %p247 = scmp.lt.s32.totalorder %s20, 0
      %s248 = scalar_select %p247, %s20, 0
      %s249 = smul.addr %s248, 4
      %s250 = scalar_lea.vmem %s1, %s249
      %p251 = scmp.lt.s32.totalorder %s20, 0
      %s252 = scalar_select %p251, %s20, 0
      %s253 = scalar_lea.vmem %s2, %s252
      %p254 = scmp.lt.s32.totalorder %s20, 0
      %s255 = scalar_select %p254, %s20, 0
      %s256 = scalar_lea.vmem %s3, %s255
      %s257 = smul.u32 32, %s19
      %p258 = scmp.lt.s32.totalorder %s257, 255
      %s259 = scalar_select %p258, %s257, 255
      %p260 = scmp.lt.s32.totalorder %s20, 0
      %s261 = scalar_select %p260, %s20, 0
      %s262 = sadd.s32 %s261, %s259
      %s263 = smul.addr %s262, 4
      %s264 = scalar_lea.vmem %s4, %s263
      %s265 = smul.u32 32, %s19
      %v267 = vld [vmem:[%s245] sm:$0xf]
      %v268 = vld [vmem:[%s245 + $0x4] sm:$0xf]
      %v269 = vld [vmem:[%s245 + $0x8] sm:$0xf]
      %v270 = vld [vmem:[%s245 + $0xc] sm:$0xf]
      %v271 = vld [vmem:[%s245 + $0x10] sm:$0xf]
      %v272 = vld [vmem:[%s245 + $0x14] sm:$0xf]
      %v273 = vld [vmem:[%s245 + $0x18] sm:$0xf]
      %v274 = vld [vmem:[%s245 + $0x1c] sm:$0xf]
      %v275 = vld [vmem:[%s245 + $0x20] sm:$0xf]
      %v276 = vld [vmem:[%s245 + $0x24] sm:$0xf]
      %v277 = vld [vmem:[%s245 + $0x28] sm:$0xf]
      %v278 = vld [vmem:[%s245 + $0x2c] sm:$0xf]
      %v279 = vld [vmem:[%s245 + $0x30] sm:$0xf]
      %v280 = vld [vmem:[%s245 + $0x34] sm:$0xf]
      %v281 = vld [vmem:[%s245 + $0x38] sm:$0xf]
      %v282 = vld [vmem:[%s245 + $0x3c] sm:$0xf]
      %v283 = vld [vmem:[%s245 + $0x40] sm:$0xf]
      %v284 = vld [vmem:[%s245 + $0x44] sm:$0xf]
      %v285 = vld [vmem:[%s245 + $0x48] sm:$0xf]
      %v286 = vld [vmem:[%s245 + $0x4c] sm:$0xf]
      %v287 = vld [vmem:[%s245 + $0x50] sm:$0xf]
      %v288 = vld [vmem:[%s245 + $0x54] sm:$0xf]
      %v289 = vld [vmem:[%s245 + $0x58] sm:$0xf]
      %v290 = vld [vmem:[%s245 + $0x5c] sm:$0xf]
      %v291 = vld [vmem:[%s245 + $0x60] sm:$0xf]
      %v292 = vld [vmem:[%s245 + $0x64] sm:$0xf]
      %v293 = vld [vmem:[%s245 + $0x68] sm:$0xf]
      %v294 = vld [vmem:[%s245 + $0x6c] sm:$0xf]
      %v295 = vld [vmem:[%s245 + $0x70] sm:$0xf]
      %v296 = vld [vmem:[%s245 + $0x74] sm:$0xf]
      %v297 = vld [vmem:[%s245 + $0x78] sm:$0xf]
      %v298 = vld [vmem:[%s245 + $0x7c] sm:$0xf]
      %v299 = vld [vmem:[%s250] sm:$0xf]
      %v300 = vld [vmem:[%s250 + $0x4] sm:$0xf]
      %v301 = vld [vmem:[%s250 + $0x8] sm:$0xf]
      %v302 = vld [vmem:[%s250 + $0xc] sm:$0x3]
      %v335 = vunpack.c.l.b16 %v267
      %v336 = vunpack.c.l.b16 %v268
      %v337 = vunpack.c.l.b16 %v269
      %v338 = vunpack.c.l.b16 %v270
      %v339 = vunpack.c.l.b16 %v271
      %v340 = vunpack.c.l.b16 %v272
      %v341 = vunpack.c.l.b16 %v273
      %v342 = vunpack.c.l.b16 %v274
      %v343 = vunpack.c.l.b16 %v275
      %v344 = vunpack.c.l.b16 %v276
      %v345 = vunpack.c.l.b16 %v277
      %v346 = vunpack.c.l.b16 %v278
      %v347 = vunpack.c.l.b16 %v279
      %v348 = vunpack.c.l.b16 %v280
      %v349 = vunpack.c.l.b16 %v281
      %v350 = vunpack.c.l.b16 %v282
      %v351 = vunpack.c.l.b16 %v283
      %v352 = vunpack.c.l.b16 %v284
      %v353 = vunpack.c.l.b16 %v285
      %v354 = vunpack.c.l.b16 %v286
      %v355 = vunpack.c.l.b16 %v287
      %v356 = vunpack.c.l.b16 %v288
      %v357 = vunpack.c.l.b16 %v289
      %v358 = vunpack.c.l.b16 %v290
      %v359 = vunpack.c.l.b16 %v291
      %v360 = vunpack.c.l.b16 %v292
      %v361 = vunpack.c.l.b16 %v293
      %v362 = vunpack.c.l.b16 %v294
      %v363 = vunpack.c.l.b16 %v295
      %v364 = vunpack.c.l.b16 %v296
      %v365 = vunpack.c.l.b16 %v297
      %v366 = vunpack.c.l.b16 %v298
      %v367 = vpack.c.b16 %v336, %v335
      %v368 = vpack.c.b16 %v338, %v337
      %v369 = vpack.c.b16 %v340, %v339
      %v370 = vpack.c.b16 %v342, %v341
      %v371 = vpack.c.b16 %v344, %v343
      %v372 = vpack.c.b16 %v346, %v345
      %v373 = vpack.c.b16 %v348, %v347
      %v374 = vpack.c.b16 %v350, %v349
      %v375 = vpack.c.b16 %v352, %v351
      %v376 = vpack.c.b16 %v354, %v353
      %v377 = vpack.c.b16 %v356, %v355
      %v378 = vpack.c.b16 %v358, %v357
      %v379 = vpack.c.b16 %v360, %v359
      %v380 = vpack.c.b16 %v362, %v361
      %v381 = vpack.c.b16 %v364, %v363
      %v382 = vpack.c.b16 %v366, %v365
      %v387 = vunpack.c.l.b16 %v299
      %v388 = vunpack.c.l.b16 %v300
      %v389 = vunpack.c.l.b16 %v301
      %v390 = vunpack.c.l.b16 %v302
      %v391 = vpack.c.b16 %v388, %v387
      %v392 = vpack.c.b16 %v390, %v389
      %vm394 = vcmask 220160
      %v396 = vsel %vm394, %v367, 0
      %v399 = vsel %vm394, %v368, 0
      %v402 = vsel %vm394, %v369, 0
      %v405 = vsel %vm394, %v370, 0
      %v408 = vsel %vm394, %v371, 0
      %v411 = vsel %vm394, %v372, 0
      %v414 = vsel %vm394, %v373, 0
      %v417 = vsel %vm394, %v374, 0
      %v420 = vsel %vm394, %v375, 0
      %v423 = vsel %vm394, %v376, 0
      %v426 = vsel %vm394, %v377, 0
      %v429 = vsel %vm394, %v378, 0
      %v432 = vsel %vm394, %v379, 0
      %v435 = vsel %vm394, %v380, 0
      %v438 = vsel %vm394, %v381, 0
      %v441 = vsel %vm394, %v382, 0
      %vm443 = vcmask 1044480
      %vm444 = vcmask 1045504
      %v445 = vsel %vm443, 4294967295, 65535
      %v446 = vsel %vm444, %v445, 0
      %v448 = vand.u32 %v392, %v446
      %450 = vmatprep.subr.bf16.mxu0 0
      %451 = vmatpush1.bf16.msra.mxu0 %v391
      %452 = vmatprep.subr.bf16.mxu0 0
      %453 = vmatpush1.bf16.msra.mxu0 %v448
      %454 = vmatprep.subr.bf16.mxu0 0
      %455 = vmatpush1.bf16.msra.mxu0 0
      %456 = vmatprep.subr.bf16.mxu0 0
      %457 = vmatpush1.bf16.msra.mxu0 0
      %458 = vmatprep.subr.bf16.mxu0 0
      %459 = vmatpush1.bf16.msra.mxu0 0
      %460 = vmatprep.subr.bf16.mxu0 0
      %461 = vmatpush1.bf16.msra.mxu0 0
      %462 = vmatprep.subr.bf16.mxu0 0
      %463 = vmatpush1.bf16.msra.mxu0 0
      %464 = vmatprep.subr.bf16.mxu0 0
      %465 = vmatpush1.bf16.msra.mxu0 0
      %466 = vmatprep.subr.bf16.mxu0 0
      %467 = vmatpush1.bf16.msra.mxu0 0
      %468 = vmatprep.subr.bf16.mxu0 0
      %469 = vmatpush1.bf16.msra.mxu0 0
      %470 = vmatprep.subr.bf16.mxu0 0
      %471 = vmatpush1.bf16.msra.mxu0 0
      %472 = vmatprep.subr.bf16.mxu0 0
      %473 = vmatpush1.bf16.msra.mxu0 0
      %474 = vmatprep.subr.bf16.mxu0 0
      %475 = vmatpush1.bf16.msra.mxu0 0
      %476 = vmatprep.subr.bf16.mxu0 0
      %477 = vmatpush1.bf16.msra.mxu0 0
      %478 = vmatprep.subr.bf16.mxu0 0
      %479 = vmatpush1.bf16.msra.mxu0 0
      %480 = vmatprep.subr.bf16.mxu0 0
      %481 = vmatpush1.bf16.msra.mxu0 0
      %482 = vmatprep.mubr.bf16.mxu0 0
      %483 = vmatmul.mubr.bf16.gmra.mrb[0].mxu0 %v396
      %v484 = vpop.f32.mrb[0].mxu0
      %v485 = vadd.f32 0.0, %v484
      %v486 = vpop.f32.mrb[0].mxu0
      %v487 = vpop.f32.mrb[0].mxu0
      %v488 = vadd.f32 0.0, %v487
      %v489 = vpop.f32.mrb[0].mxu0
      %490 = vmatprep.mubr.bf16.mxu0 0
      %491 = vmatmul.mubr.bf16.gmra.mrb[0].mxu0 %v399
      %v492 = vpop.f32.mrb[0].mxu0
      %v493 = vadd.f32 0.0, %v492
      %v494 = vpop.f32.mrb[0].mxu0
      %v495 = vpop.f32.mrb[0].mxu0
      %v496 = vadd.f32 0.0, %v495
      %v497 = vpop.f32.mrb[0].mxu0
      %498 = vmatprep.mubr.bf16.mxu0 0
      %499 = vmatmul.mubr.bf16.gmra.mrb[0].mxu0 %v402
      %v500 = vpop.f32.mrb[0].mxu0
      %v501 = vadd.f32 0.0, %v500
      %v502 = vpop.f32.mrb[0].mxu0
      %v503 = vpop.f32.mrb[0].mxu0
      %v504 = vadd.f32 0.0, %v503
      %v505 = vpop.f32.mrb[0].mxu0
      %506 = vmatprep.mubr.bf16.mxu0 0
      %507 = vmatmul.mubr.bf16.gmra.mrb[0].mxu0 %v405
      %v508 = vpop.f32.mrb[0].mxu0
      %v509 = vadd.f32 0.0, %v508
      %v510 = vpop.f32.mrb[0].mxu0
      %v511 = vpop.f32.mrb[0].mxu0
      %v512 = vadd.f32 0.0, %v511
      %v513 = vpop.f32.mrb[0].mxu0
      %514 = vmatprep.mubr.bf16.mxu0 0
      %515 = vmatmul.mubr.bf16.gmra.mrb[0].mxu0 %v408
      %v516 = vpop.f32.mrb[0].mxu0
      %v517 = vadd.f32 0.0, %v516
      %v518 = vpop.f32.mrb[0].mxu0
      %v519 = vpop.f32.mrb[0].mxu0
      %v520 = vadd.f32 0.0, %v519
      %v521 = vpop.f32.mrb[0].mxu0
      %522 = vmatprep.mubr.bf16.mxu0 0
      %523 = vmatmul.mubr.bf16.gmra.mrb[0].mxu0 %v411
      %v524 = vpop.f32.mrb[0].mxu0
      %v525 = vadd.f32 0.0, %v524
      %v526 = vpop.f32.mrb[0].mxu0
      %v527 = vpop.f32.mrb[0].mxu0
      %v528 = vadd.f32 0.0, %v527
      %v529 = vpop.f32.mrb[0].mxu0
      %530 = vmatprep.mubr.bf16.mxu0 0
      %531 = vmatmul.mubr.bf16.gmra.mrb[0].mxu0 %v414
      %v532 = vpop.f32.mrb[0].mxu0
      %v533 = vadd.f32 0.0, %v532
      %v534 = vpop.f32.mrb[0].mxu0
      %v535 = vpop.f32.mrb[0].mxu0
      %v536 = vadd.f32 0.0, %v535
      %v537 = vpop.f32.mrb[0].mxu0
      %538 = vmatprep.mubr.bf16.mxu0 0
      %539 = vmatmul.mubr.bf16.gmra.mrb[0].mxu0 %v417
      %v540 = vpop.f32.mrb[0].mxu0
      %v541 = vadd.f32 0.0, %v540
      %v542 = vpop.f32.mrb[0].mxu0
      %v543 = vpop.f32.mrb[0].mxu0
      %v544 = vadd.f32 0.0, %v543
      %v545 = vpop.f32.mrb[0].mxu0
      %546 = vmatprep.mubr.bf16.mxu0 0
      %547 = vmatmul.mubr.bf16.gmra.mrb[0].mxu0 %v420
      %v548 = vpop.f32.mrb[0].mxu0
      %v549 = vadd.f32 0.0, %v548
      %v550 = vpop.f32.mrb[0].mxu0
      %v551 = vpop.f32.mrb[0].mxu0
      %v552 = vadd.f32 0.0, %v551
      %v553 = vpop.f32.mrb[0].mxu0
      %554 = vmatprep.mubr.bf16.mxu0 0
      %555 = vmatmul.mubr.bf16.gmra.mrb[0].mxu0 %v423
      %v556 = vpop.f32.mrb[0].mxu0
      %v557 = vadd.f32 0.0, %v556
      %v558 = vpop.f32.mrb[0].mxu0
      %v559 = vpop.f32.mrb[0].mxu0
      %v560 = vadd.f32 0.0, %v559
      %v561 = vpop.f32.mrb[0].mxu0
      %562 = vmatprep.mubr.bf16.mxu0 0
      %563 = vmatmul.mubr.bf16.gmra.mrb[0].mxu0 %v426
      %v564 = vpop.f32.mrb[0].mxu0
      %v565 = vadd.f32 0.0, %v564
      %v566 = vpop.f32.mrb[0].mxu0
      %v567 = vpop.f32.mrb[0].mxu0
      %v568 = vadd.f32 0.0, %v567
      %v569 = vpop.f32.mrb[0].mxu0
      %570 = vmatprep.mubr.bf16.mxu0 0
      %571 = vmatmul.mubr.bf16.gmra.mrb[0].mxu0 %v429
      %v572 = vpop.f32.mrb[0].mxu0
      %v573 = vadd.f32 0.0, %v572
      %v574 = vpop.f32.mrb[0].mxu0
      %v575 = vpop.f32.mrb[0].mxu0
      %v576 = vadd.f32 0.0, %v575
      %v577 = vpop.f32.mrb[0].mxu0
      %578 = vmatprep.mubr.bf16.mxu0 0
      %579 = vmatmul.mubr.bf16.gmra.mrb[0].mxu0 %v432
      %v580 = vpop.f32.mrb[0].mxu0
      %v581 = vadd.f32 0.0, %v580
      %v582 = vpop.f32.mrb[0].mxu0
      %v583 = vpop.f32.mrb[0].mxu0
      %v584 = vadd.f32 0.0, %v583
      %v585 = vpop.f32.mrb[0].mxu0
      %586 = vmatprep.mubr.bf16.mxu0 0
      %587 = vmatmul.mubr.bf16.gmra.mrb[0].mxu0 %v435
      %v588 = vpop.f32.mrb[0].mxu0
      %v589 = vadd.f32 0.0, %v588
      %v590 = vpop.f32.mrb[0].mxu0
      %v591 = vpop.f32.mrb[0].mxu0
      %v592 = vadd.f32 0.0, %v591
      %v593 = vpop.f32.mrb[0].mxu0
      %594 = vmatprep.mubr.bf16.mxu0 0
      %595 = vmatmul.mubr.bf16.gmra.mrb[0].mxu0 %v438
      %v596 = vpop.f32.mrb[0].mxu0
      %v597 = vadd.f32 0.0, %v596
      %v598 = vpop.f32.mrb[0].mxu0
      %v599 = vpop.f32.mrb[0].mxu0
      %v600 = vadd.f32 0.0, %v599
      %v601 = vpop.f32.mrb[0].mxu0
      %602 = vmatprep.mubr.bf16.mxu0 0
      %603 = vmatmul.mubr.bf16.gmra.mrb[0].mxu0 %v441
      %v604 = vpop.f32.mrb[0].mxu0
      %v605 = vadd.f32 0.0, %v604
      %v606 = vpop.f32.mrb[0].mxu0
      %v607 = vpop.f32.mrb[0].mxu0
      %v608 = vadd.f32 0.0, %v607
      %v609 = vpop.f32.mrb[0].mxu0
      %610 = vdwg.mxu0
      %v611 = vld [vmem:[%s253] sm:$0x1]
      %v613 = vlaneseq
      %v614 = vshrl.u32 %v613, 7
      %v615 = vsub.s32 0, %v614
      %v616 = vrot.slane %v611, %v615
      %v618 = vmul.f32 %v485, %v616
      %v619 = vmul.f32 %v488, %v616
      %v620 = vmul.f32 %v493, %v616
      %v621 = vmul.f32 %v496, %v616
      %v622 = vmul.f32 %v501, %v616
      %v623 = vmul.f32 %v504, %v616
      %v624 = vmul.f32 %v509, %v616
      %v625 = vmul.f32 %v512, %v616
      %v626 = vmul.f32 %v517, %v616
      %v627 = vmul.f32 %v520, %v616
      %v628 = vmul.f32 %v525, %v616
      %v629 = vmul.f32 %v528, %v616
      %v630 = vmul.f32 %v533, %v616
      %v631 = vmul.f32 %v536, %v616
      %v632 = vmul.f32 %v541, %v616
      %v633 = vmul.f32 %v544, %v616
      %v634 = vmul.f32 %v549, %v616
      %v635 = vmul.f32 %v552, %v616
      %v636 = vmul.f32 %v557, %v616
      %v637 = vmul.f32 %v560, %v616
      %v638 = vmul.f32 %v565, %v616
      %v639 = vmul.f32 %v568, %v616
      %v640 = vmul.f32 %v573, %v616
      %v641 = vmul.f32 %v576, %v616
      %v642 = vmul.f32 %v581, %v616
      %v643 = vmul.f32 %v584, %v616
      %v644 = vmul.f32 %v589, %v616
      %v645 = vmul.f32 %v592, %v616
      %v646 = vmul.f32 %v597, %v616
      %v647 = vmul.f32 %v600, %v616
      %v648 = vmul.f32 %v605, %v616
      %v649 = vmul.f32 %v608, %v616
      %v650 = vld [vmem:[%s256] sm:$0x1]
      %v652 = vlaneseq
      %v653 = vshrl.u32 %v652, 7
      %v654 = vsub.s32 0, %v653
      %v655 = vrot.slane %v650, %v654
      %v657 = vadd.f32 %v618, %v655
      %v658 = vadd.f32 %v619, %v655
      %v659 = vadd.f32 %v620, %v655
      %v660 = vadd.f32 %v621, %v655
      %v661 = vadd.f32 %v622, %v655
      %v662 = vadd.f32 %v623, %v655
      %v663 = vadd.f32 %v624, %v655
      %v664 = vadd.f32 %v625, %v655
      %v665 = vadd.f32 %v626, %v655
      %v666 = vadd.f32 %v627, %v655
      %v667 = vadd.f32 %v628, %v655
      %v668 = vadd.f32 %v629, %v655
      %v669 = vadd.f32 %v630, %v655
      %v670 = vadd.f32 %v631, %v655
      %v671 = vadd.f32 %v632, %v655
      %v672 = vadd.f32 %v633, %v655
      %v673 = vadd.f32 %v634, %v655
      %v674 = vadd.f32 %v635, %v655
      %v675 = vadd.f32 %v636, %v655
      %v676 = vadd.f32 %v637, %v655
      %v677 = vadd.f32 %v638, %v655
      %v678 = vadd.f32 %v639, %v655
      %v679 = vadd.f32 %v640, %v655
      %v680 = vadd.f32 %v641, %v655
      %v681 = vadd.f32 %v642, %v655
      %v682 = vadd.f32 %v643, %v655
      %v683 = vadd.f32 %v644, %v655
      %v684 = vadd.f32 %v645, %v655
      %v685 = vadd.f32 %v646, %v655
      %v686 = vadd.f32 %v647, %v655
      %v687 = vadd.f32 %v648, %v655
      %v688 = vadd.f32 %v649, %v655
      %vm689 = vcmp.gt.f32.partialorder %v657, 0.0
      %vm690 = vcmp.gt.f32.partialorder %v658, 0.0
      %vm691 = vcmp.gt.f32.partialorder %v659, 0.0
      %vm692 = vcmp.gt.f32.partialorder %v660, 0.0
      %vm693 = vcmp.gt.f32.partialorder %v661, 0.0
      %vm694 = vcmp.gt.f32.partialorder %v662, 0.0
      %vm695 = vcmp.gt.f32.partialorder %v663, 0.0
      %vm696 = vcmp.gt.f32.partialorder %v664, 0.0
      %vm697 = vcmp.gt.f32.partialorder %v665, 0.0
      %vm698 = vcmp.gt.f32.partialorder %v666, 0.0
      %vm699 = vcmp.gt.f32.partialorder %v667, 0.0
      %vm700 = vcmp.gt.f32.partialorder %v668, 0.0
      %vm701 = vcmp.gt.f32.partialorder %v669, 0.0
      %vm702 = vcmp.gt.f32.partialorder %v670, 0.0
      %vm703 = vcmp.gt.f32.partialorder %v671, 0.0
      %vm704 = vcmp.gt.f32.partialorder %v672, 0.0
      %vm705 = vcmp.gt.f32.partialorder %v673, 0.0
      %vm706 = vcmp.gt.f32.partialorder %v674, 0.0
      %vm707 = vcmp.gt.f32.partialorder %v675, 0.0
      %vm708 = vcmp.gt.f32.partialorder %v676, 0.0
      %vm709 = vcmp.gt.f32.partialorder %v677, 0.0
      %vm710 = vcmp.gt.f32.partialorder %v678, 0.0
      %vm711 = vcmp.gt.f32.partialorder %v679, 0.0
      %vm712 = vcmp.gt.f32.partialorder %v680, 0.0
      %vm713 = vcmp.gt.f32.partialorder %v681, 0.0
      %vm714 = vcmp.gt.f32.partialorder %v682, 0.0
      %vm715 = vcmp.gt.f32.partialorder %v683, 0.0
      %vm716 = vcmp.gt.f32.partialorder %v684, 0.0
      %vm717 = vcmp.gt.f32.partialorder %v685, 0.0
      %vm718 = vcmp.gt.f32.partialorder %v686, 0.0
      %vm719 = vcmp.gt.f32.partialorder %v687, 0.0
      %vm720 = vcmp.gt.f32.partialorder %v688, 0.0
      %v721 = vmul.f32 %v657, 0.01
      %v722 = vmul.f32 %v658, 0.01
      %v723 = vmul.f32 %v659, 0.01
      %v724 = vmul.f32 %v660, 0.01
      %v725 = vmul.f32 %v661, 0.01
      %v726 = vmul.f32 %v662, 0.01
      %v727 = vmul.f32 %v663, 0.01
      %v728 = vmul.f32 %v664, 0.01
      %v729 = vmul.f32 %v665, 0.01
      %v730 = vmul.f32 %v666, 0.01
      %v731 = vmul.f32 %v667, 0.01
      %v732 = vmul.f32 %v668, 0.01
      %v733 = vmul.f32 %v669, 0.01
      %v734 = vmul.f32 %v670, 0.01
      %v735 = vmul.f32 %v671, 0.01
      %v736 = vmul.f32 %v672, 0.01
      %v737 = vmul.f32 %v673, 0.01
      %v738 = vmul.f32 %v674, 0.01
      %v739 = vmul.f32 %v675, 0.01
      %v740 = vmul.f32 %v676, 0.01
      %v741 = vmul.f32 %v677, 0.01
      %v742 = vmul.f32 %v678, 0.01
      %v743 = vmul.f32 %v679, 0.01
      %v744 = vmul.f32 %v680, 0.01
      %v745 = vmul.f32 %v681, 0.01
      %v746 = vmul.f32 %v682, 0.01
      %v747 = vmul.f32 %v683, 0.01
      %v748 = vmul.f32 %v684, 0.01
      %v749 = vmul.f32 %v685, 0.01
      %v750 = vmul.f32 %v686, 0.01
      %v751 = vmul.f32 %v687, 0.01
      %v752 = vmul.f32 %v688, 0.01
      %v753 = vsel %vm689, %v657, %v721
      %v754 = vsel %vm690, %v658, %v722
      %v755 = vsel %vm691, %v659, %v723
      %v756 = vsel %vm692, %v660, %v724
      %v757 = vsel %vm693, %v661, %v725
      %v758 = vsel %vm694, %v662, %v726
      %v759 = vsel %vm695, %v663, %v727
      %v760 = vsel %vm696, %v664, %v728
      %v761 = vsel %vm697, %v665, %v729
      %v762 = vsel %vm698, %v666, %v730
      %v763 = vsel %vm699, %v667, %v731
      %v764 = vsel %vm700, %v668, %v732
      %v765 = vsel %vm701, %v669, %v733
      %v766 = vsel %vm702, %v670, %v734
      %v767 = vsel %vm703, %v671, %v735
      %v768 = vsel %vm704, %v672, %v736
      %v769 = vsel %vm705, %v673, %v737
      %v770 = vsel %vm706, %v674, %v738
      %v771 = vsel %vm707, %v675, %v739
      %v772 = vsel %vm708, %v676, %v740
      %v773 = vsel %vm709, %v677, %v741
      %v774 = vsel %vm710, %v678, %v742
      %v775 = vsel %vm711, %v679, %v743
      %v776 = vsel %vm712, %v680, %v744
      %v777 = vsel %vm713, %v681, %v745
      %v778 = vsel %vm714, %v682, %v746
      %v779 = vsel %vm715, %v683, %v747
      %v780 = vsel %vm716, %v684, %v748
      %v781 = vsel %vm717, %v685, %v749
      %v782 = vsel %vm718, %v686, %v750
      %v783 = vsel %vm719, %v687, %v751
      %v784 = vsel %vm720, %v688, %v752
      %v785 = vpack.c.bf16 %v754, %v753
      %v786 = vpack.c.bf16 %v756, %v755
      %v787 = vpack.c.bf16 %v758, %v757
      %v788 = vpack.c.bf16 %v760, %v759
      %v789 = vpack.c.bf16 %v762, %v761
      %v790 = vpack.c.bf16 %v764, %v763
      %v791 = vpack.c.bf16 %v766, %v765
      %v792 = vpack.c.bf16 %v768, %v767
      %v793 = vpack.c.bf16 %v770, %v769
      %v794 = vpack.c.bf16 %v772, %v771
      %v795 = vpack.c.bf16 %v774, %v773
      %v796 = vpack.c.bf16 %v776, %v775
      %v797 = vpack.c.bf16 %v778, %v777
      %v798 = vpack.c.bf16 %v780, %v779
      %v799 = vpack.c.bf16 %v782, %v781
      %v800 = vpack.c.bf16 %v784, %v783
      %v817 = vunpack.c.l.b16 %v785
      %v818 = vunpack.c.h.b16 %v785
      %v819 = vunpack.c.l.b16 %v786
      %v820 = vunpack.c.h.b16 %v786
      %v821 = vunpack.c.l.b16 %v787
      %v822 = vunpack.c.h.b16 %v787
      %v823 = vunpack.c.l.b16 %v788
      %v824 = vunpack.c.h.b16 %v788
      %v825 = vunpack.c.l.b16 %v789
      %v826 = vunpack.c.h.b16 %v789
      %v827 = vunpack.c.l.b16 %v790
      %v828 = vunpack.c.h.b16 %v790
      %v829 = vunpack.c.l.b16 %v791
      %v830 = vunpack.c.h.b16 %v791
      %v831 = vunpack.c.l.b16 %v792
      %v832 = vunpack.c.h.b16 %v792
      %v833 = vunpack.c.l.b16 %v793
      %v834 = vunpack.c.h.b16 %v793
      %v835 = vunpack.c.l.b16 %v794
      %v836 = vunpack.c.h.b16 %v794
      %v837 = vunpack.c.l.b16 %v795
      %v838 = vunpack.c.h.b16 %v795
      %v839 = vunpack.c.l.b16 %v796
      %v840 = vunpack.c.h.b16 %v796
      %v841 = vunpack.c.l.b16 %v797
      %v842 = vunpack.c.h.b16 %v797
      %v843 = vunpack.c.l.b16 %v798
      %v844 = vunpack.c.h.b16 %v798
      %v845 = vunpack.c.l.b16 %v799
      %v846 = vunpack.c.h.b16 %v799
      %v847 = vunpack.c.l.b16 %v800
      %v848 = vunpack.c.h.b16 %v800
      %v849 = vpack.c.b16 %v817, %v817
      %v850 = vpack.c.b16 %v818, %v818
      %v851 = vpack.c.b16 %v819, %v819
      %v852 = vpack.c.b16 %v820, %v820
      %v853 = vpack.c.b16 %v821, %v821
      %v854 = vpack.c.b16 %v822, %v822
      %v855 = vpack.c.b16 %v823, %v823
      %v856 = vpack.c.b16 %v824, %v824
      %v857 = vpack.c.b16 %v825, %v825
      %v858 = vpack.c.b16 %v826, %v826
      %v859 = vpack.c.b16 %v827, %v827
      %v860 = vpack.c.b16 %v828, %v828
      %v861 = vpack.c.b16 %v829, %v829
      %v862 = vpack.c.b16 %v830, %v830
      %v863 = vpack.c.b16 %v831, %v831
      %v864 = vpack.c.b16 %v832, %v832
      %v865 = vpack.c.b16 %v833, %v833
      %v866 = vpack.c.b16 %v834, %v834
      %v867 = vpack.c.b16 %v835, %v835
      %v868 = vpack.c.b16 %v836, %v836
      %v869 = vpack.c.b16 %v837, %v837
      %v870 = vpack.c.b16 %v838, %v838
      %v871 = vpack.c.b16 %v839, %v839
      %v872 = vpack.c.b16 %v840, %v840
      %v873 = vpack.c.b16 %v841, %v841
      %v874 = vpack.c.b16 %v842, %v842
      %v875 = vpack.c.b16 %v843, %v843
      %v876 = vpack.c.b16 %v844, %v844
      %v877 = vpack.c.b16 %v845, %v845
      %v878 = vpack.c.b16 %v846, %v846
      %v879 = vpack.c.b16 %v847, %v847
      %v880 = vpack.c.b16 %v848, %v848
      %vm913 = vcmask 519168
      %914 = vst.msk [vmem:[%s264] sm:$0xf] %vm913, %v849
      %915 = vst.msk [vmem:[%s264 + $0x4] sm:$0xf] %vm913, %v850
      %916 = vst.msk [vmem:[%s264 + $0x8] sm:$0xf] %vm913, %v851
      %917 = vst.msk [vmem:[%s264 + $0xc] sm:$0xf] %vm913, %v852
      %918 = vst.msk [vmem:[%s264 + $0x10] sm:$0xf] %vm913, %v853
      %919 = vst.msk [vmem:[%s264 + $0x14] sm:$0xf] %vm913, %v854
      %920 = vst.msk [vmem:[%s264 + $0x18] sm:$0xf] %vm913, %v855
      %921 = vst.msk [vmem:[%s264 + $0x1c] sm:$0xf] %vm913, %v856
      %922 = vst.msk [vmem:[%s264 + $0x20] sm:$0xf] %vm913, %v857
      %923 = vst.msk [vmem:[%s264 + $0x24] sm:$0xf] %vm913, %v858
      %924 = vst.msk [vmem:[%s264 + $0x28] sm:$0xf] %vm913, %v859
      %925 = vst.msk [vmem:[%s264 + $0x2c] sm:$0xf] %vm913, %v860
      %926 = vst.msk [vmem:[%s264 + $0x30] sm:$0xf] %vm913, %v861
      %927 = vst.msk [vmem:[%s264 + $0x34] sm:$0xf] %vm913, %v862
      %928 = vst.msk [vmem:[%s264 + $0x38] sm:$0xf] %vm913, %v863
      %929 = vst.msk [vmem:[%s264 + $0x3c] sm:$0xf] %vm913, %v864
      %930 = vst.msk [vmem:[%s264 + $0x40] sm:$0xf] %vm913, %v865
      %931 = vst.msk [vmem:[%s264 + $0x44] sm:$0xf] %vm913, %v866
      %932 = vst.msk [vmem:[%s264 + $0x48] sm:$0xf] %vm913, %v867
      %933 = vst.msk [vmem:[%s264 + $0x4c] sm:$0xf] %vm913, %v868
      %934 = vst.msk [vmem:[%s264 + $0x50] sm:$0xf] %vm913, %v869
      %935 = vst.msk [vmem:[%s264 + $0x54] sm:$0xf] %vm913, %v870
      %936 = vst.msk [vmem:[%s264 + $0x58] sm:$0xf] %vm913, %v871
      %937 = vst.msk [vmem:[%s264 + $0x5c] sm:$0xf] %vm913, %v872
      %938 = vst.msk [vmem:[%s264 + $0x60] sm:$0xf] %vm913, %v873
      %939 = vst.msk [vmem:[%s264 + $0x64] sm:$0xf] %vm913, %v874
      %940 = vst.msk [vmem:[%s264 + $0x68] sm:$0xf] %vm913, %v875
      %941 = vst.msk [vmem:[%s264 + $0x6c] sm:$0xf] %vm913, %v876
      %942 = vst.msk [vmem:[%s264 + $0x70] sm:$0xf] %vm913, %v877
      %943 = vst.msk [vmem:[%s264 + $0x74] sm:$0xf] %vm913, %v878
      %944 = vst.msk [vmem:[%s264 + $0x78] sm:$0xf] %vm913, %v879
      %945 = vst.msk [vmem:[%s264 + $0x7c] sm:$0xf] %vm913, %v880
      %s946 = smul.u32 32, %s19
      %p947 = scmp.lt.s32.totalorder %s946, 255
      %s948 = scalar_select %p947, %s946, 255
      %p949 = scmp.lt.s32.totalorder %s20, 0
      %s950 = scalar_select %p949, %s20, 0
      %s951 = sadd.s32 %s950, %s948
      %s952 = smul.addr %s951, 4
      %s953 = scalar_lea.vmem %s4, %s952
      // Predicated region
      $region37: #{tpu_custom_call.1} parent=35 // pred_check
        %p954 = pneg %p151
      $region38: #{tpu_custom_call.1} parent=35 // pred_check_branch
        %956 = sbr.rel (%p954) target = $region40
      $region39: #{tpu_custom_call.1} parent=35 // pred_region
        %s957 = smul.u32 32, %s19
      $region40: #{tpu_custom_call.1} parent=35 // pred_fallthru
        _
    $region36: #{tpu_custom_call.1} parent=5 // pred_fallthru
      _
    %p958 = scmp.le.s32.totalorder 2, %s10
    // Predicated region
    $region41: #{tpu_custom_call.1} parent=5 // pred_check
      %p959 = pneg %p958
    $region42: #{tpu_custom_call.1} parent=5 // pred_check_branch
      %961 = sbr.rel (%p959) target = $region44
    $region43: #{tpu_custom_call.1} parent=5 // pred_region
      %s962 = ssub.s32 %s10, 2
      // Predicated region
      $region45: #{tpu_custom_call.1} parent=43 // pred_check
        %p963 = pneg %p157
      $region46: #{tpu_custom_call.1} parent=43 // pred_check_branch
        %965 = sbr.rel (%p963) target = $region48
      $region47: #{tpu_custom_call.1} parent=43 // pred_region
        %s966 = smul.u32 32, %s21
        %p967 = scmp.lt.s32.totalorder %s966, 255
        %s968 = scalar_select %p967, %s966, 255
        %p969 = scmp.lt.s32.totalorder %s22, 0
        %s970 = scalar_select %p969, %s22, 0
        %s971 = sadd.s32 %s970, %s968
        %s972 = smul.addr %s971, 4
        %s973 = scalar_lea.vmem %s4, %s972
      $region48: #{tpu_custom_call.1} parent=43 // pred_fallthru
        _
    $region44: #{tpu_custom_call.1} parent=5 // pred_fallthru
      _
  $region6: #{tpu_custom_call.1} parent=0 // loop_footer
    %s14 = sadd.s32 1, %s10
  $region7: #{tpu_custom_call.1} parent=0 // loop_footer_branch
    %9 = sbr.rel target = $region3
  $region8: #{tpu_custom_call.1} parent=0 // loop_exit
    _

</llo_original>
